<compile_context>
chip_gen: v7x
topology: tpu7x:2x2x1
jax: 0.10.0
libtpu: 0.0.40
codegen_flags: <defaults>
</compile_context>

<pallas_src>
import jax
import jax.numpy as jnp
from jax import lax
from jax.experimental import pallas as pl
from jax.experimental.pallas import tpu as pltpu

LOWER_BOUND = 1e-4  # GreaterThan(1e-4): noise = softplus(raw_noise) + 1e-4


def _make_kernel(n: int):
    """Kernel closure over the (static) number of evaluation points `n`."""
    diag_stride = n + 1  # diagonal positions of a flattened (n, n) row

    def kernel(raw_noise_ref, out_ref):
        # raw_noise_ref: SMEM ref, shape (1,)   (num_tasks = 1, non-batched)
        # out_ref:       VMEM block, shape (tb, tc) of the flattened
        #                (batch_elems, n*n) output.
        tb, tc = out_ref.shape
        raw = raw_noise_ref[0]
        # Softplus on a single (tb, 1) column instead of the whole tile:
        # O(tb) transcendentals instead of O(tb*tc); lane-broadcast in `where`.
        noise = jax.nn.softplus(jnp.full((tb, 1), raw, jnp.float32)) + LOWER_BOUND
        # Global flattened column index within this batch row.
        col = pl.program_id(1) * tc + lax.broadcasted_iota(jnp.int32, (tb, tc), 1)
        diag = jnp.where(col % diag_stride == 0, noise, jnp.float32(0.0))
        out_ref[...] = diag.astype(out_ref.dtype)

    return kernel


def _pick_block(batch_elems: int, nn: int):
    """Choose a lane-dense (tb, tc) block of roughly <= 2 MiB (f32).

    Constraints honored: tc is a multiple of 128 or equal to nn; tb is a
    multiple of 8 or equal to batch_elems.
    """
    budget_elems = (2 << 20) // 4  # ~2 MiB of f32 per output block

    if batch_elems * nn <= budget_elems:
        # Whole flattened output fits in one block (tiny-output case: the
        # grid collapses to a single step, minimizing per-step overhead).
        return batch_elems, nn
    if nn >= budget_elems // 8:
        # Very wide rows (large n): keep <= 8 batch rows per block and tile
        # the lane axis. Keeps blocks well under v7x's smaller VMEM.
        tb = batch_elems if batch_elems < 8 else 8
        tc = min(nn, max(128, (budget_elems // tb) // 128 * 128))
        return tb, tc
    # Many small rows: full rows per block, tile the batch axis in
    # multiples of 8.
    tb = min(batch_elems, max(8, (budget_elems // nn) // 8 * 8))
    return tb, nn


def homoskedastic_noise_forward(raw_noise, x):
    """Equivalent of HomoskedasticNoise.forward(x) for num_tasks == 1.

    raw_noise: (1,) float parameter (torch.zeros(num_tasks) with num_tasks=1).
    x:         (*batch_shape, n, d) evaluation points (or (n,) 1-D input).
    returns:   (*batch_shape, n, n) diagonal noise covariance matrices.
    """
    if raw_noise.ndim != 1 or raw_noise.shape[0] != 1:
        # TODO(synk): num_tasks > 1 and batched raw_noise broadcasting are
        # pure shape plumbing on top of the same kernel; not emitted here.
        raise NotImplementedError("only num_tasks == 1, non-batched noise")

    shape = x.shape if x.ndim == 1 else x.shape[:-1]  # torch: p.shape[:-1]
    *batch_shape, n = shape
    batch_elems = 1
    for b in batch_shape:
        batch_elems *= b
    batch_elems = max(batch_elems, 1)
    nn = n * n
    out_dtype = raw_noise.dtype  # follow the parameter dtype (PyTorch behavior)

    tb, tc = _pick_block(batch_elems, nn)
    grid = (pl.cdiv(batch_elems, tb), pl.cdiv(nn, tc))

    out = pl.pallas_call(
        _make_kernel(n),
        out_shape=jax.ShapeDtypeStruct((batch_elems, nn), out_dtype),
        grid=grid,
        in_specs=[pl.BlockSpec(memory_space=pltpu.MemorySpace.SMEM)],
        out_specs=pl.BlockSpec((tb, tc), lambda i, j: (i, j)),
        compiler_params=pltpu.CompilerParams(
            dimension_semantics=("parallel", "parallel")),
    )(raw_noise)

    return out.reshape(*batch_shape, n, n)


if __name__ == "__main__":
    key = jax.random.PRNGKey(0)
    B, N, D = 2, 16, 8
    x = jax.random.normal(key, (B, N, D), dtype=jnp.float32)

    # Deterministic parameter init, matching Parameter(torch.zeros(num_tasks)).
    raw_noise = jnp.zeros((1,), dtype=jnp.float32)

    out = homoskedastic_noise_forward(raw_noise, x)
    out = jax.block_until_ready(out)

    # Pure-JAX reference: constant diagonal of softplus(0) + 1e-4.
    noise_val = jax.nn.softplus(raw_noise[0]) + LOWER_BOUND
    ref = jnp.broadcast_to(jnp.eye(N, dtype=jnp.float32) * noise_val, (B, N, N))

    assert out.shape == (B, N, N), out.shape
    assert jnp.allclose(out, ref, atol=1e-6), "mismatch vs reference (batched)"

    # Non-batched input path: x of shape (N, D) -> output (N, N).
    out2 = jax.block_until_ready(homoskedastic_noise_forward(raw_noise, x[0]))
    assert out2.shape == (N, N), out2.shape
    assert jnp.allclose(out2, ref[0], atol=1e-6), "mismatch vs reference (non-batched)"

    print("KERNEL_OK")
</pallas_src>

<mosaic_0001>
module attributes {stable_mosaic.version = 11 : i64} {
  func.func @kernel(%arg0: i32, %arg1: i32, %arg2: memref<1xf32, #tpu.memory_space<smem>>, %arg3: memref<2x256xf32, #tpu.memory_space<vmem>>) attributes {dimension_semantics = [#tpu.dimension_semantics<parallel>, #tpu.dimension_semantics<parallel>], iteration_bounds = array<i64: 1, 1>, scalar_prefetch = 0 : i64, scratch_operands = 0 : i64, tpu.core_type = #tpu.core_type<tc>, window_params = [{transform_indices = @transform_0, window_bounds = array<i64: 1>}, {transform_indices = @transform_1, window_bounds = array<i64: 2, 256>}]} {
    %c0 = arith.constant 0 : index
    %0 = memref.load %arg2[%c0] : memref<1xf32, #tpu.memory_space<smem>>
    %1 = vector.broadcast %0 : f32 to vector<2x1xf32>
    %cst = arith.constant 0.000000e+00 : f32
    %2 = vector.broadcast %cst : f32 to vector<2x1xf32>
    %3 = arith.maximumf %1, %2 : vector<2x1xf32>
    %4 = vector.broadcast %cst : f32 to vector<2x1xf32>
    %5 = arith.subf %1, %4 : vector<2x1xf32>
    %6 = arith.cmpf one, %5, %5 : vector<2x1xf32>
    %7 = vector.broadcast %cst : f32 to vector<2x1xf32>
    %8 = arith.addf %1, %7 : vector<2x1xf32>
    %9 = math.absf %5 : vector<2x1xf32>
    %cst_0 = arith.constant 0.000000e+00 : f32
    %10 = vector.broadcast %cst_0 : f32 to vector<2x1xf32>
    %11 = arith.subf %10, %9 : vector<2x1xf32>
    %12 = math.exp %11 : vector<2x1xf32>
    %13 = math.log1p %12 : vector<2x1xf32>
    %14 = arith.addf %3, %13 : vector<2x1xf32>
    %15 = arith.select %6, %8, %14 : vector<2x1xi1>, vector<2x1xf32>
    %cst_1 = arith.constant 9.99999974E-5 : f32
    %16 = vector.broadcast %cst_1 : f32 to vector<2x1xf32>
    %17 = arith.addf %15, %16 : vector<2x1xf32>
    %c256_i32 = arith.constant 256 : i32
    %18 = arith.muli %arg1, %c256_i32 : i32
    %19 = tpu.iota {dimensions = array<i32: 1>} : vector<2x256xi32>
    %20 = vector.broadcast %18 : i32 to vector<2x256xi32>
    %21 = arith.addi %20, %19 : vector<2x256xi32>
    %c17_i32 = arith.constant 17 : i32
    %c0_i32 = arith.constant 0 : i32
    %22 = arith.cmpi eq, %c17_i32, %c0_i32 : i32
    %c1_i32 = arith.constant 1 : i32
    %23 = arith.select %22, %c1_i32, %c17_i32 : i32
    %24 = vector.broadcast %23 : i32 to vector<2x256xi32>
    %25 = arith.remsi %21, %24 : vector<2x256xi32>
    %c0_i32_2 = arith.constant 0 : i32
    %26 = vector.broadcast %c0_i32_2 : i32 to vector<2x256xi32>
    %27 = arith.cmpi ne, %25, %26 : vector<2x256xi32>
    %c0_i32_3 = arith.constant 0 : i32
    %28 = vector.broadcast %c0_i32_3 : i32 to vector<2x256xi32>
    %29 = arith.cmpi slt, %25, %28 : vector<2x256xi32>
    %c0_i32_4 = arith.constant 0 : i32
    %30 = arith.cmpi slt, %23, %c0_i32_4 : i32
    %31 = vector.broadcast %30 : i1 to vector<2x256xi1>
    %32 = vector.broadcast %31 : vector<2x256xi1> to vector<2x256xi1>
    %33 = arith.xori %29, %32 : vector<2x256xi1>
    %34 = arith.andi %33, %27 : vector<2x256xi1>
    %35 = vector.broadcast %23 : i32 to vector<2x256xi32>
    %36 = arith.addi %25, %35 : vector<2x256xi32>
    %37 = arith.select %34, %36, %25 : vector<2x256xi1>, vector<2x256xi32>
    %c0_i32_5 = arith.constant 0 : i32
    %38 = vector.broadcast %c0_i32_5 : i32 to vector<2x256xi32>
    %39 = arith.cmpi eq, %37, %38 : vector<2x256xi32>
    %cst_6 = arith.constant 0.000000e+00 : f32
    %40 = vector.shape_cast %17 : vector<2x1xf32> to vector<2x1xf32>
    %41 = vector.broadcast %40 : vector<2x1xf32> to vector<2x256xf32>
    %42 = vector.broadcast %cst_6 : f32 to vector<2x256xf32>
    %43 = arith.select %39, %41, %42 : vector<2x256xi1>, vector<2x256xf32>
    %c0_7 = arith.constant 0 : index
    %c0_8 = arith.constant 0 : index
    %44 = vector.load %arg3[%c0_7, %c0_8] : memref<2x256xf32, #tpu.memory_space<vmem>>, vector<2x256xf32>
    tpu.vector_store %arg3[%c0_7, %c0_8], %43 {strides = array<i32>} : memref<2x256xf32, #tpu.memory_space<vmem>>, vector<2x256xf32>,
    return
  }
  func.func @transform_0(%arg0: i32, %arg1: i32) -> i32 {
    %c0_i32 = arith.constant 0 : i32
    %c0_i32_0 = arith.constant 0 : i32
    return %c0_i32 : i32
  }
  func.func @transform_1(%arg0: i32, %arg1: i32) -> (i32, i32) {
    %c0_i32 = arith.constant 0 : i32
    return %arg0, %arg1 : i32, i32
  }
}

</mosaic_0001>

<llo_original>
// kernel: tpu_custom_call.1
$region0: #{tpu_custom_call.1}
  #allocation0 [shape = 'u32[]', space=smem, size = 0x4, offset = 0x4, fixed_abs, tag = 'smem constant byte address 0x4 - core index']
  #allocation1 [shape = 'u32[144,128]{1,0:T(1,128)}', space=vmem, size = 0x12000, scoped, tag = 'internal scratch']
  #allocation2 [shape = 'f32[1]{0:T(128)S(6)}', space=smem, size = 0x200, scoped, tag = 'scoped memory for tpu_custom_call.1']
  %s0 = inlined_call_operand.<no memory space> [shape: f32[1], index: 0, kind: input, shape index: {}]
  %s1 = inlined_call_operand.hbm [shape: f32[2,256], index: 1, kind: output, shape index: {}]
  %s2 = sld [smem:[#allocation0]]
  $region14: #{tpu_custom_call.1} parent=0
    _
  %s4 = ssub.s32 1, %s2
  %s5 = scalar_select 0, %s4, %s2
  %6 = sst [smem:[#allocation2]] %s0
  $region1: #{tpu_custom_call.1} parent=0
    #allocation3 [shape = 'u8[2048]{0}', space=vmem, size = 0x800, scoped, tag = 'output window, operand 0, single buffered']
    #allocation4 [shape = 's32[1]{0}', space=sflag, size = 0x4, scoped, tag = 'scoped memory for tpu_custom_call.1']
    %7 = vsyncpa [#allocation4], 0
    // Predicated region
    $region2: #{tpu_custom_call.1} parent=1 // pred_check
      _
    $region3: #{tpu_custom_call.1} parent=1 // pred_check_branch
      %9 = sbr.rel (0) target = $region5
    $region4: #{tpu_custom_call.1} parent=1 // pred_region
      _
    $region5: #{tpu_custom_call.1} parent=1 // pred_fallthru
      _
    %s10 = sld [smem:[#allocation2]]
    %v11 = vstv %s10
    %v12 = vmax.f32 %v11, 0.0
    %vm13 = vcmp.ne.f32.partialorder %v11, %v11
    %v14 = vadd.f32 %v11, 0.0
    %v15 = vand.u32 2147483647, %v11
    %v16 = vsub.f32 0.0, %v15
    %v17 = vmul.f32 %v16, 1.442695
    %v18 = vpow.pop %v17
    %v19 = vadd.f32 %v18, 1.0
    %v20 = vlog2.pop %v19
    %v21 = vmul.f32 %v20, 0.6931472
    %v22 = vmul.f32 -0.5, %v18
    %v23 = vadd.f32 %v22, 1.0
    %v24 = vmul.f32 %v23, %v18
    %v25 = vand.u32 2147483647, %v18
    %vm26 = vcmp.lt.f32.partialorder %v25, 0.0004427343
    %v27 = vsel %vm26, %v24, %v21
    %v28 = vadd.f32 %v12, %v27
    %v29 = vsel %vm13, %v14, %v28
    %v30 = vadd.f32 %v29, 0.0001
    %s31 = smul.u32 0, 256
    %v32 = vlaneseq
    %v33 = vand.u32 %v32, 127
    %v34 = vadd.s32 %v33, 128
    %v35 = vstv %s31
    %v36 = vadd.s32 %v35, %v33
    %v37 = vadd.s32 %v35, %v34
    %vm38 = vcmp.lt.s32.totalorder %v36, 0
    %v39 = vsub.s32 0, %v36
    %v40 = vsel %vm38, %v39, %v36
    %v41 = vmul.u32.u64.compose %v40, 4042322161
    %v42 = vextract.low.u32 %v41
    %v43 = vextract.high.u32 %v41
    %v44 = vshrl.u32 %v43, 4
    %v45 = vmul.u32 %v44, 17
    %v46 = vsub.s32 %v40, %v45
    %v47 = vsub.s32 0, %v46
    %v48 = vsel %vm38, %v47, %v46
    %vm49 = vcmp.lt.s32.totalorder %v37, 0
    %v50 = vsub.s32 0, %v37
    %v51 = vsel %vm49, %v50, %v37
    %v52 = vmul.u32.u64.compose %v51, 4042322161
    %v53 = vextract.low.u32 %v52
    %v54 = vextract.high.u32 %v52
    %v55 = vshrl.u32 %v54, 4
    %v56 = vmul.u32 %v55, 17
    %v57 = vsub.s32 %v51, %v56
    %v58 = vsub.s32 0, %v57
    %v59 = vsel %vm49, %v58, %v57
    %vm60 = vcmp.ne.s32.totalorder %v48, 0
    %vm61 = vcmp.ne.s32.totalorder %v59, 0
    %vm62 = vcmp.lt.s32.totalorder %v48, 0
    %vm63 = vcmp.lt.s32.totalorder %v59, 0
    %vm64 = vmand %vm62, %vm60
    %vm65 = vmand %vm63, %vm61
    %v66 = vadd.s32 %v48, 17
    %v67 = vadd.s32 %v59, 17
    %v68 = vsel %vm64, %v66, %v48
    %v69 = vsel %vm65, %v67, %v59
    %vm70 = vcmp.eq.s32.totalorder %v68, 0
    %vm71 = vcmp.eq.s32.totalorder %v69, 0
    %v72 = vsel %vm70, %v30, 0.0
    %v73 = vsel %vm71, %v30, 0.0
    %v76 = vcombine.low %v72, %v73
    %v78 = vunpack.c.l.s4 1983009808
    %v79 = vunpack.c.0.s8 %v78
    %v80 = vlaneseq
    %v81 = vshrl.u32 %v80, 7
    %v82 = vsub.s32 %v79, %v81
    %v83 = vrot.slane %v76, %v82
    %85 = vst [vmem:[#allocation3] sm:$0xf] %v83
    // Predicated region
    $region6: #{tpu_custom_call.1} parent=1 // pred_check
      _
    $region7: #{tpu_custom_call.1} parent=1 // pred_check_branch
      %87 = sbr.rel (0) target = $region9
    $region8: #{tpu_custom_call.1} parent=1 // pred_region
      %s89 = ssub.s32 64, 64
      %90 = vsyncadd [#allocation4], %s89
      %s92 = sshll.u32 [#allocation3], 4
      %s93 = int_to_ptr.vmem [resolvable:$true] %s92
      %95 = dma.vmem_to_hbm [thread:$0]  %s93, 64, %s1, [#allocation4]
    $region9: #{tpu_custom_call.1} parent=1 // pred_fallthru
      _
    // Predicated region
    $region10: #{tpu_custom_call.1} parent=1 // pred_check
      _
    $region11: #{tpu_custom_call.1} parent=1 // pred_check_branch
      %97 = sbr.rel (0) target = $region13
    $region12: #{tpu_custom_call.1} parent=1 // pred_region
      %98 = dma.done [#allocation4], 64
    $region13: #{tpu_custom_call.1} parent=1 // pred_fallthru
      _
    %99 = vsyncpa [#allocation4], 1

</llo_original>
